<compile_context>
chip_gen: v6e
topology: v6e:2x2x1
jax: 0.10.0
libtpu: 0.0.40
codegen_flags: <defaults>
</compile_context>

<pallas_src>
import functools

import jax
import jax.numpy as jnp
from jax import lax
from jax.experimental import pallas as pl
from jax.experimental.pallas import tpu as pltpu

# Dropout p = 0.3 quantized to a byte threshold: drop iff byte < 77
# -> p_drop = 77/256 ~= 0.3008 (TODO(synk): exact 0.3 would need >8-bit fields).
_DROP_BYTE_THRESH = 77
_KEEP_SCALE = 256.0 / (256.0 - _DROP_BYTE_THRESH)   # 1 / keep_prob (quantized)

_H1, _H2, _H3 = 10, 20, 10                           # BP_2Net hidden widths


def _round_up(n, m):
    return ((n + m - 1) // m) * m


def _fmix32(x):
    """murmur3-style 32-bit finalizer (uint32 in, uint32 out)."""
    x = jnp.bitwise_xor(x, lax.shift_right_logical(x, jnp.uint32(16)))
    x = x * jnp.uint32(0x7FEB352D)
    x = jnp.bitwise_xor(x, lax.shift_right_logical(x, jnp.uint32(15)))
    x = x * jnp.uint32(0x846CA68B)
    x = jnp.bitwise_xor(x, lax.shift_right_logical(x, jnp.uint32(16)))
    return x


def _dropout_bits(tb, row_off_u32, key_u32):
    """One (tb, 20) uint32 hash; bytes 0/1/2 are the three layer mask fields.

    Counter = (global_row << 5) | col  -- unique per element (20 cols < 32);
    wraps only for > 2^27 rows, which is harmless for dropout.
    """
    rows = lax.broadcasted_iota(jnp.int32, (tb, _H2), 0).astype(jnp.uint32) + row_off_u32
    cols = lax.broadcasted_iota(jnp.int32, (tb, _H2), 1).astype(jnp.uint32)
    ctr = (rows << 5) | cols
    return _fmix32(jnp.bitwise_xor(ctr, key_u32) * jnp.uint32(0x9E3779B9))


def _apply_dropout(h, bits, byte_idx):
    """Integer-threshold dropout from an 8-bit field of the shared hash."""
    b = (bits[:, : h.shape[1]] >> (8 * byte_idx)) & 0xFF
    keep = b >= _DROP_BYTE_THRESH
    return jnp.where(keep, h * jnp.float32(_KEEP_SCALE), jnp.float32(0.0))


def bp2net_kernel(seed_ref,                 # scalar-prefetch (SMEM)
                  x_ref, p_ref,             # inputs
                  o_ref,                    # output
                  *, n_feature, n_output):
    i = pl.program_id(0)
    tb = x_ref.shape[0]
    row_off = (i * tb).astype(jnp.uint32)          # global row offset of tile
    key = seed_ref[0].astype(jnp.uint32)

    # One hash pass per tile; reused by all three dropout layers.
    bits = _dropout_bits(tb, row_off, key)

    # Packed, VMEM-resident parameter slab.  Row layout:
    #   [w1 (n_feature) | b1 (1) | w2 (10) | b2 (1) | w3 (20) | b3 (1)
    #    | w4 (10) | b4 (1)],  columns = max(20, n_output).
    P = p_ref[...]
    o1 = n_feature + 1
    o2 = o1 + _H1 + 1
    o3 = o2 + _H2 + 1
    w1 = P[0:n_feature, 0:_H1]
    b1 = P[n_feature:n_feature + 1, 0:_H1]
    w2 = P[o1:o1 + _H1, 0:_H2]
    b2 = P[o1 + _H1:o1 + _H1 + 1, 0:_H2]
    w3 = P[o2:o2 + _H2, 0:_H3]
    b3 = P[o2 + _H2:o2 + _H2 + 1, 0:_H3]
    w4 = P[o3:o3 + _H3, 0:n_output]
    b4 = P[o3 + _H3:o3 + _H3 + 1, 0:n_output]

    x = x_ref[...]
    h = jnp.maximum(jnp.dot(x, w1, preferred_element_type=jnp.float32) + b1, 0.0)
    h = _apply_dropout(h, bits, 0)
    h = jnp.maximum(jnp.dot(h, w2, preferred_element_type=jnp.float32) + b2, 0.0)
    h = _apply_dropout(h, bits, 1)
    h = jnp.maximum(jnp.dot(h, w3, preferred_element_type=jnp.float32) + b3, 0.0)
    h = _apply_dropout(h, bits, 2)
    out = jnp.dot(h, w4, preferred_element_type=jnp.float32) + b4
    o_ref[...] = out.astype(o_ref.dtype)


def bp2net_forward(x, w1, b1, w2, b2, w3, b3, w4, b4, seed, *, tb=1024):
    """Fused MLP forward (training-mode dropout), gridded over the batch."""
    B, n_feature = x.shape
    n_output = w4.shape[1]

    # Batch tiling: big tiles (overhead/mem-bound kernel), but cap the tile so
    # the grid has >= 2 steps whenever B allows it (keeps both v7x TCs busy).
    B8 = _round_up(B, 8)
    tb_cap = max(8, _round_up((B8 + 1) // 2, 8))
    tb_eff = max(8, min(_round_up(tb, 8), tb_cap))
    Bp = _round_up(B8, tb_eff)
    xp = jnp.pad(x, ((0, Bp - B), (0, 0))) if Bp != B else x
    grid = (Bp // tb_eff,)

    # Pack all weights/biases into one resident slab (single in_spec).
    C = max(_H2, n_output)
    padc = lambda a: jnp.pad(a, ((0, 0), (0, C - a.shape[1]))).astype(jnp.float32)
    slab = jnp.concatenate(
        [padc(w1), padc(b1), padc(w2), padc(b2),
         padc(w3), padc(b3), padc(w4), padc(b4)], axis=0)

    kernel = functools.partial(bp2net_kernel,
                               n_feature=n_feature, n_output=n_output)

    grid_spec = pltpu.PrefetchScalarGridSpec(
        num_scalar_prefetch=1,
        grid=grid,
        in_specs=[
            pl.BlockSpec((tb_eff, n_feature), lambda i, seed_ref: (i, 0)),
            pl.BlockSpec(slab.shape, lambda i, seed_ref: (0, 0)),  # resident
        ],
        # Unpadded output: block last dim == full array dim -> only the real
        # n_output columns are ever written back to HBM.
        out_specs=pl.BlockSpec((tb_eff, n_output), lambda i, seed_ref: (i, 0)),
    )

    flops = 2 * Bp * (n_feature * _H1 + _H1 * _H2 + _H2 * _H3 + _H3 * n_output)
    bytes_accessed = 4 * (Bp * n_feature + int(slab.size) + Bp * n_output)

    out = pl.pallas_call(
        kernel,
        out_shape=jax.ShapeDtypeStruct((Bp, n_output), jnp.float32),
        grid_spec=grid_spec,
        compiler_params=pltpu.CompilerParams(
            dimension_semantics=("parallel",)),      # batch tiles independent
        cost_estimate=pl.CostEstimate(
            flops=flops, transcendentals=0, bytes_accessed=bytes_accessed),
    )(seed, xp, slab)

    return out[:B]


def bp2net_reference(x, w1, b1, w2, b2, w3, b3, w4, b4, seed):
    """Pure-JAX reference with the identical (tile-invariant) dropout hash."""
    B = x.shape[0]
    key = seed[0].astype(jnp.uint32)
    rows = jnp.arange(B, dtype=jnp.uint32)[:, None]
    cols = jnp.arange(_H2, dtype=jnp.uint32)[None, :]
    ctr = (rows << 5) | cols
    bits = _fmix32(jnp.bitwise_xor(ctr, key) * jnp.uint32(0x9E3779B9))

    h = jnp.maximum(x @ w1 + b1, 0.0)
    h = _apply_dropout(h, bits, 0)
    h = jnp.maximum(h @ w2 + b2, 0.0)
    h = _apply_dropout(h, bits, 1)
    h = jnp.maximum(h @ w3 + b3, 0.0)
    h = _apply_dropout(h, bits, 2)
    return h @ w4 + b4


def init_params(key, n_feature, n_output):
    """Matches BP_2Net.initialize_weights: W ~ N(0, 0.1), b = 0."""
    ks = jax.random.split(key, 4)
    dims = [(n_feature, _H1), (_H1, _H2), (_H2, _H3), (_H3, n_output)]
    params = []
    for k, (din, dout) in zip(ks, dims):
        w = 0.1 * jax.random.normal(k, (din, dout), dtype=jnp.float32)
        b = jnp.zeros((1, dout), dtype=jnp.float32)
        params.extend([w, b])
    return params


if __name__ == "__main__":
    key = jax.random.PRNGKey(0)
    kx, kp = jax.random.split(key)

    B, n_feature, n_output = 64, 32, 4
    x = jax.random.normal(kx, (B, n_feature), dtype=jnp.float32)
    params = init_params(kp, n_feature, n_output)
    seed = jnp.array([0], dtype=jnp.int32)

    out = bp2net_forward(x, *params, seed, tb=1024)   # -> grid of 2 batch tiles
    jax.block_until_ready(out)

    assert out.shape == (B, n_output)
    assert bool(jnp.all(jnp.isfinite(out)))
    ref = bp2net_reference(x, *params, seed)
    assert bool(jnp.allclose(out, ref, rtol=1e-3, atol=1e-3))
    print("KERNEL_OK")
</pallas_src>

<mosaic_0001>
module attributes {stable_mosaic.version = 11 : i64} {
  func.func @bp2net_kernel(%arg0: i32, %arg1: memref<1xi32, #tpu.memory_space<smem>>, %arg2: memref<32x32xf32, #tpu.memory_space<vmem>>, %arg3: memref<76x20xf32, #tpu.memory_space<vmem>>, %arg4: memref<32x4xf32, #tpu.memory_space<vmem>>) attributes {dimension_semantics = [#tpu.dimension_semantics<parallel>], iteration_bounds = array<i64: 2>, scalar_prefetch = 1 : i64, scratch_operands = 0 : i64, tpu.core_type = #tpu.core_type<tc>, window_params = [{transform_indices = @transform_0, window_bounds = array<i64: 32, 32>}, {pipeline_mode = #tpu.pipeline_mode<synchronous>, transform_indices = @transform_1, window_bounds = array<i64: 76, 20>}, {transform_indices = @transform_2, window_bounds = array<i64: 32, 4>}]} {
    %c32_i32 = arith.constant 32 : i32
    %0 = arith.muli %arg0, %c32_i32 : i32
    %c0 = arith.constant 0 : index
    %1 = memref.load %arg1[%c0] : memref<1xi32, #tpu.memory_space<smem>>
    %2 = tpu.iota {dimensions = array<i32: 0>} : vector<32x20xi32>
    %3 = vector.broadcast %0 : i32 to vector<32x20xi32>
    %4 = arith.addi %2, %3 : vector<32x20xi32>
    %5 = tpu.iota {dimensions = array<i32: 1>} : vector<32x20xi32>
    %c5_i32 = arith.constant 5 : i32
    %6 = vector.broadcast %c5_i32 : i32 to vector<32x20xi32>
    %7 = arith.shli %4, %6 : vector<32x20xi32>
    %8 = arith.ori %7, %5 : vector<32x20xi32>
    %9 = vector.broadcast %1 : i32 to vector<32x20xi32>
    %10 = arith.xori %8, %9 : vector<32x20xi32>
    %c-1640531527_i32 = arith.constant -1640531527 : i32
    %11 = vector.broadcast %c-1640531527_i32 : i32 to vector<32x20xi32>
    %12 = arith.muli %10, %11 : vector<32x20xi32>
    %c16_i32 = arith.constant 16 : i32
    %13 = vector.broadcast %c16_i32 : i32 to vector<32x20xi32>
    %14 = arith.shrui %12, %13 : vector<32x20xi32>
    %15 = arith.xori %12, %14 : vector<32x20xi32>
    %c2146121005_i32 = arith.constant 2146121005 : i32
    %16 = vector.broadcast %c2146121005_i32 : i32 to vector<32x20xi32>
    %17 = arith.muli %15, %16 : vector<32x20xi32>
    %c15_i32 = arith.constant 15 : i32
    %18 = vector.broadcast %c15_i32 : i32 to vector<32x20xi32>
    %19 = arith.shrui %17, %18 : vector<32x20xi32>
    %20 = arith.xori %17, %19 : vector<32x20xi32>
    %c-2073254261_i32 = arith.constant -2073254261 : i32
    %21 = vector.broadcast %c-2073254261_i32 : i32 to vector<32x20xi32>
    %22 = arith.muli %20, %21 : vector<32x20xi32>
    %c16_i32_0 = arith.constant 16 : i32
    %23 = vector.broadcast %c16_i32_0 : i32 to vector<32x20xi32>
    %24 = arith.shrui %22, %23 : vector<32x20xi32>
    %25 = arith.xori %22, %24 : vector<32x20xi32>
    %c0_1 = arith.constant 0 : index
    %c0_2 = arith.constant 0 : index
    %26 = vector.load %arg3[%c0_1, %c0_2] : memref<76x20xf32, #tpu.memory_space<vmem>>, vector<76x20xf32>
    %27 = vector.extract_strided_slice %26 {offsets = [0, 0], sizes = [32, 10], strides = [1, 1]} : vector<76x20xf32> to vector<32x10xf32>
    %28 = vector.extract_strided_slice %26 {offsets = [32, 0], sizes = [1, 10], strides = [1, 1]} : vector<76x20xf32> to vector<1x10xf32>
    %29 = vector.extract_strided_slice %26 {offsets = [33, 0], sizes = [10, 20], strides = [1, 1]} : vector<76x20xf32> to vector<10x20xf32>
    %30 = vector.extract_strided_slice %26 {offsets = [43, 0], sizes = [1, 20], strides = [1, 1]} : vector<76x20xf32> to vector<1x20xf32>
    %31 = vector.extract_strided_slice %26 {offsets = [44, 0], sizes = [20, 10], strides = [1, 1]} : vector<76x20xf32> to vector<20x10xf32>
    %32 = vector.extract_strided_slice %26 {offsets = [64, 0], sizes = [1, 10], strides = [1, 1]} : vector<76x20xf32> to vector<1x10xf32>
    %33 = vector.extract_strided_slice %26 {offsets = [65, 0], sizes = [10, 4], strides = [1, 1]} : vector<76x20xf32> to vector<10x4xf32>
    %34 = vector.extract_strided_slice %26 {offsets = [75, 0], sizes = [1, 4], strides = [1, 1]} : vector<76x20xf32> to vector<1x4xf32>
    %c0_3 = arith.constant 0 : index
    %c0_4 = arith.constant 0 : index
    %35 = vector.load %arg2[%c0_3, %c0_4] : memref<32x32xf32, #tpu.memory_space<vmem>>, vector<32x32xf32>
    %cst = arith.constant dense<0.000000e+00> : vector<32x10xf32>
    %36 = tpu.matmul %35, %27, %cst {dimension_numbers = #tpu.dot_dimension_numbers<[1], [0], [0], [1], [0, 0, 1, 1], [], []>} : vector<32x32xf32>, vector<32x10xf32>, vector<32x10xf32> -> vector<32x10xf32>
    %37 = vector.broadcast %28 : vector<1x10xf32> to vector<32x10xf32>
    %38 = arith.addf %36, %37 : vector<32x10xf32>
    %cst_5 = arith.constant 0.000000e+00 : f32
    %39 = vector.broadcast %cst_5 : f32 to vector<32x10xf32>
    %40 = arith.maximumf %38, %39 : vector<32x10xf32>
    %41 = vector.extract_strided_slice %25 {offsets = [0, 0], sizes = [32, 10], strides = [1, 1]} : vector<32x20xi32> to vector<32x10xi32>
    %c0_i32 = arith.constant 0 : i32
    %42 = vector.broadcast %c0_i32 : i32 to vector<32x10xi32>
    %43 = arith.shrui %41, %42 : vector<32x10xi32>
    %c255_i32 = arith.constant 255 : i32
    %44 = vector.broadcast %c255_i32 : i32 to vector<32x10xi32>
    %45 = arith.andi %43, %44 : vector<32x10xi32>
    %c77_i32 = arith.constant 77 : i32
    %46 = vector.broadcast %c77_i32 : i32 to vector<32x10xi32>
    %47 = arith.cmpi uge, %45, %46 : vector<32x10xi32>
    %cst_6 = arith.constant 1.43016756 : f32
    %48 = vector.broadcast %cst_6 : f32 to vector<32x10xf32>
    %49 = arith.mulf %40, %48 : vector<32x10xf32>
    %cst_7 = arith.constant 0.000000e+00 : f32
    %50 = vector.broadcast %cst_7 : f32 to vector<32x10xf32>
    %51 = arith.select %47, %49, %50 : vector<32x10xi1>, vector<32x10xf32>
    %cst_8 = arith.constant dense<0.000000e+00> : vector<32x20xf32>
    %52 = tpu.matmul %51, %29, %cst_8 {dimension_numbers = #tpu.dot_dimension_numbers<[1], [0], [0], [1], [0, 0, 1, 1], [], []>} : vector<32x10xf32>, vector<10x20xf32>, vector<32x20xf32> -> vector<32x20xf32>
    %53 = vector.broadcast %30 : vector<1x20xf32> to vector<32x20xf32>
    %54 = arith.addf %52, %53 : vector<32x20xf32>
    %cst_9 = arith.constant 0.000000e+00 : f32
    %55 = vector.broadcast %cst_9 : f32 to vector<32x20xf32>
    %56 = arith.maximumf %54, %55 : vector<32x20xf32>
    %c8_i32 = arith.constant 8 : i32
    %57 = vector.broadcast %c8_i32 : i32 to vector<32x20xi32>
    %58 = arith.shrui %25, %57 : vector<32x20xi32>
    %c255_i32_10 = arith.constant 255 : i32
    %59 = vector.broadcast %c255_i32_10 : i32 to vector<32x20xi32>
    %60 = arith.andi %58, %59 : vector<32x20xi32>
    %c77_i32_11 = arith.constant 77 : i32
    %61 = vector.broadcast %c77_i32_11 : i32 to vector<32x20xi32>
    %62 = arith.cmpi uge, %60, %61 : vector<32x20xi32>
    %cst_12 = arith.constant 1.43016756 : f32
    %63 = vector.broadcast %cst_12 : f32 to vector<32x20xf32>
    %64 = arith.mulf %56, %63 : vector<32x20xf32>
    %cst_13 = arith.constant 0.000000e+00 : f32
    %65 = vector.broadcast %cst_13 : f32 to vector<32x20xf32>
    %66 = arith.select %62, %64, %65 : vector<32x20xi1>, vector<32x20xf32>
    %cst_14 = arith.constant dense<0.000000e+00> : vector<32x10xf32>
    %67 = tpu.matmul %66, %31, %cst_14 {dimension_numbers = #tpu.dot_dimension_numbers<[1], [0], [0], [1], [0, 0, 1, 1], [], []>} : vector<32x20xf32>, vector<20x10xf32>, vector<32x10xf32> -> vector<32x10xf32>
    %68 = vector.broadcast %32 : vector<1x10xf32> to vector<32x10xf32>
    %69 = arith.addf %67, %68 : vector<32x10xf32>
    %cst_15 = arith.constant 0.000000e+00 : f32
    %70 = vector.broadcast %cst_15 : f32 to vector<32x10xf32>
    %71 = arith.maximumf %69, %70 : vector<32x10xf32>
    %72 = vector.extract_strided_slice %25 {offsets = [0, 0], sizes = [32, 10], strides = [1, 1]} : vector<32x20xi32> to vector<32x10xi32>
    %c16_i32_16 = arith.constant 16 : i32
    %73 = vector.broadcast %c16_i32_16 : i32 to vector<32x10xi32>
    %74 = arith.shrui %72, %73 : vector<32x10xi32>
    %c255_i32_17 = arith.constant 255 : i32
    %75 = vector.broadcast %c255_i32_17 : i32 to vector<32x10xi32>
    %76 = arith.andi %74, %75 : vector<32x10xi32>
    %c77_i32_18 = arith.constant 77 : i32
    %77 = vector.broadcast %c77_i32_18 : i32 to vector<32x10xi32>
    %78 = arith.cmpi uge, %76, %77 : vector<32x10xi32>
    %cst_19 = arith.constant 1.43016756 : f32
    %79 = vector.broadcast %cst_19 : f32 to vector<32x10xf32>
    %80 = arith.mulf %71, %79 : vector<32x10xf32>
    %cst_20 = arith.constant 0.000000e+00 : f32
    %81 = vector.broadcast %cst_20 : f32 to vector<32x10xf32>
    %82 = arith.select %78, %80, %81 : vector<32x10xi1>, vector<32x10xf32>
    %cst_21 = arith.constant dense<0.000000e+00> : vector<32x4xf32>
    %83 = tpu.matmul %82, %33, %cst_21 {dimension_numbers = #tpu.dot_dimension_numbers<[1], [0], [0], [1], [0, 0, 1, 1], [], []>} : vector<32x10xf32>, vector<10x4xf32>, vector<32x4xf32> -> vector<32x4xf32>
    %84 = vector.broadcast %34 : vector<1x4xf32> to vector<32x4xf32>
    %85 = arith.addf %83, %84 : vector<32x4xf32>
    %c0_22 = arith.constant 0 : index
    %c0_23 = arith.constant 0 : index
    %86 = vector.load %arg4[%c0_22, %c0_23] : memref<32x4xf32, #tpu.memory_space<vmem>>, vector<32x4xf32>
    tpu.vector_store %arg4[%c0_22, %c0_23], %85 {strides = array<i32>} : memref<32x4xf32, #tpu.memory_space<vmem>>, vector<32x4xf32>,
    return
  }
  func.func @transform_0(%arg0: i32, %arg1: memref<1xi32, #tpu.memory_space<smem>>) -> (i32, i32) {
    %c0_i32 = arith.constant 0 : i32
    %c0_i32_0 = arith.constant 0 : i32
    return %arg0, %c0_i32 : i32, i32
  }
  func.func @transform_1(%arg0: i32, %arg1: memref<1xi32, #tpu.memory_space<smem>>) -> (i32, i32) {
    %c0_i32 = arith.constant 0 : i32
    %c0_i32_0 = arith.constant 0 : i32
    %c0_i32_1 = arith.constant 0 : i32
    return %c0_i32, %c0_i32_0 : i32, i32
  }
  func.func @transform_2(%arg0: i32, %arg1: memref<1xi32, #tpu.memory_space<smem>>) -> (i32, i32) {
    %c0_i32 = arith.constant 0 : i32
    %c0_i32_0 = arith.constant 0 : i32
    return %arg0, %c0_i32 : i32, i32
  }
}

</mosaic_0001>

<llo_original>
// kernel: tpu_custom_call.1
$region0: #{tpu_custom_call.1}
  #allocation0 [shape = 'u32[]', space=smem, size = 0x4, offset = 0x4, fixed_abs, tag = 'smem constant byte address 0x4 - core index']
  #allocation1 [shape = 'u32[144,128]{1,0:T(1,128)}', space=vmem, size = 0x12000, scoped, tag = 'internal scratch']
  #allocation2 [shape = 's32[1]{0}', space=sflag, size = 0x4, scoped, tag = 'scoped memory for tpu_custom_call.1']
  #allocation3 [shape = 's32[1]{0:T(128)S(6)}', space=smem, size = 0x200, scoped, tag = 'prefetched SMEM operand 0']
  %s0 = inlined_call_operand.<no memory space> [shape: s32[1], index: 0, kind: input, shape index: {}]
  %s1 = inlined_call_operand.vmem [shape: f32[64,32], index: 1, kind: input, shape index: {}]
  %s2 = inlined_call_operand.vmem [shape: f32[76,20], index: 2, kind: input, shape index: {}]
  %s3 = inlined_call_operand.vmem [shape: f32[64,4], index: 3, kind: output, shape index: {}]
  %s4 = sld [smem:[#allocation0]]
  $region41: #{tpu_custom_call.1} parent=0
    _
  %s6 = ssub.s32 1, %s4
  %s7 = scalar_select 0, %s6, %s4
  %8 = sst [smem:[#allocation3]] %s0
  loop: start=0, step=1, limit=4
  $region2: #{tpu_custom_call.1} parent=0 // loop_pre_header
    _
  $region3: #{tpu_custom_call.1} parent=0 // loop_header
    %s10 = sphi 0, %s14
    %p11 = scmp.ge.s32.totalorder %s10, 4
    %s20 = sphi 0, %s22
    %s23 = sphi 0, %s20
    %s24 = sphi 0, %s23
    %s40 = sphi 0, %s24
    %s44 = sphi 0, %s44
    %s46 = sphi 0, %s44
    %s47 = sphi 0, %s46
    %s61 = sphi 0, %s47
    %s67 = sphi 0, %s69
    %s70 = sphi 0, %s67
    %s71 = sphi 0, %s70
    %s87 = sphi 0, %s71
  $region4: #{tpu_custom_call.1} parent=0 // loop_header_branch
    %13 = sbr.rel (%p11) target = $region8
  $region5: #{tpu_custom_call.1} parent=0 // loop_body
    %s15 = ssub.s32 %s10, 1
    %s16 = ssub.s32 %s10, 2
    %s17 = sadd.s32 %s10, 1
    %s18 = ssub.s32 %s10, %s17
    %p19 = scmp.eq.s32.totalorder %s18, 0
    %s21 = sadd.s32 %s20, 1
    %s22 = scalar_select %p19, %s20, %s21
    %p25 = pneg %p19
    %p26 = scmp.eq.s32.totalorder %s10, 1
    %p27 = por %p25, %p26
    %p28 = scmp.ne.s32.totalorder %s20, %s23
    %p29 = scmp.eq.s32.totalorder %s10, 0
    %p30 = por %p28, %p29
    %p31 = scmp.ne.s32.totalorder %s20, %s23
    %p32 = scmp.eq.s32.totalorder %s15, 1
    %p33 = por %p31, %p32
    %p34 = scmp.ne.s32.totalorder %s23, %s24
    %p35 = scmp.eq.s32.totalorder %s15, 0
    %p36 = por %p34, %p35
    %p37 = scmp.ne.s32.totalorder %s23, %s24
    %p38 = scmp.eq.s32.totalorder %s16, 1
    %p39 = por %p37, %p38
    %p41 = scmp.ne.s32.totalorder %s24, %s40
    %p42 = scmp.eq.s32.totalorder %s16, 0
    %p43 = por %p41, %p42
    %s45 = sadd.s32 %s44, 1
    %p48 = scmp.eq.s32.totalorder %s10, 1
    %p49 = scmp.ne.s32.totalorder %s44, %s46
    %p50 = scmp.eq.s32.totalorder %s10, 0
    %p51 = por %p49, %p50
    %p52 = scmp.ne.s32.totalorder %s44, %s46
    %p53 = scmp.eq.s32.totalorder %s15, 1
    %p54 = por %p52, %p53
    %p55 = scmp.ne.s32.totalorder %s46, %s47
    %p56 = scmp.eq.s32.totalorder %s15, 0
    %p57 = por %p55, %p56
    %p58 = scmp.ne.s32.totalorder %s46, %s47
    %p59 = scmp.eq.s32.totalorder %s16, 1
    %p60 = por %p58, %p59
    %p62 = scmp.ne.s32.totalorder %s47, %s61
    %p63 = scmp.eq.s32.totalorder %s16, 0
    %p64 = por %p62, %p63
    %s65 = ssub.s32 %s10, %s17
    %p66 = scmp.eq.s32.totalorder %s65, 0
    %s68 = sadd.s32 %s67, 1
    %s69 = scalar_select %p66, %s67, %s68
    %p72 = pneg %p66
    %p73 = scmp.eq.s32.totalorder %s10, 1
    %p74 = por %p72, %p73
    %p75 = scmp.ne.s32.totalorder %s67, %s70
    %p76 = scmp.eq.s32.totalorder %s10, 0
    %p77 = por %p75, %p76
    %p78 = scmp.ne.s32.totalorder %s67, %s70
    %p79 = scmp.eq.s32.totalorder %s15, 1
    %p80 = por %p78, %p79
    %p81 = scmp.ne.s32.totalorder %s70, %s71
    %p82 = scmp.eq.s32.totalorder %s15, 0
    %p83 = por %p81, %p82
    %p84 = scmp.ne.s32.totalorder %s70, %s71
    %p85 = scmp.eq.s32.totalorder %s16, 1
    %p86 = por %p84, %p85
    %p88 = scmp.ne.s32.totalorder %s71, %s87
    %p89 = scmp.eq.s32.totalorder %s16, 0
    %p90 = por %p88, %p89
    %p91 = scmp.le.s32.totalorder 1, %s10
    %p92 = scmp.lt.s32.totalorder %s10, 3
    %p93 = pnand %p91, %p92
    %p94 = pneg %p93
    // Predicated region
    $region9: #{tpu_custom_call.1} parent=5 // pred_check
      _
    $region10: #{tpu_custom_call.1} parent=5 // pred_check_branch
      %96 = sbr.rel (%p93) target = $region12
    $region11: #{tpu_custom_call.1} parent=5 // pred_region
      %s97 = ssub.s32 %s10, 1
      // Predicated region
      $region13: #{tpu_custom_call.1} parent=11 // pred_check
        %p98 = pneg %p57
      $region14: #{tpu_custom_call.1} parent=11 // pred_check_branch
        %100 = sbr.rel (%p98) target = $region16
      $region15: #{tpu_custom_call.1} parent=11 // pred_region
        _
      $region16: #{tpu_custom_call.1} parent=11 // pred_fallthru
        _
    $region12: #{tpu_custom_call.1} parent=5 // pred_fallthru
      _
    %p101 = scmp.lt.s32.totalorder %s10, 2
    // Predicated region
    $region17: #{tpu_custom_call.1} parent=5 // pred_check
      %p102 = pneg %p101
    $region18: #{tpu_custom_call.1} parent=5 // pred_check_branch
      %104 = sbr.rel (%p102) target = $region20
    $region19: #{tpu_custom_call.1} parent=5 // pred_region
      // Predicated region
      $region21: #{tpu_custom_call.1} parent=19 // pred_check
        %p105 = pneg %p30
      $region22: #{tpu_custom_call.1} parent=19 // pred_check_branch
        %107 = sbr.rel (%p105) target = $region24
      $region23: #{tpu_custom_call.1} parent=19 // pred_region
        %s108 = smul.u32 4, %s10
        %p109 = scmp.lt.s32.totalorder %s108, 7
        %s110 = scalar_select %p109, %s108, 7
        %s111 = smul.addr %s110, 8
        %s112 = scalar_lea.vmem %s1, %s111
        %s113 = smul.u32 4, %s10
      $region24: #{tpu_custom_call.1} parent=19 // pred_fallthru
        _
    $region20: #{tpu_custom_call.1} parent=5 // pred_fallthru
      _
    %p114 = scmp.le.s32.totalorder 1, %s10
    %p115 = scmp.lt.s32.totalorder %s10, 3
    %p116 = pnand %p114, %p115
    %p117 = pneg %p116
    // Predicated region
    $region25: #{tpu_custom_call.1} parent=5 // pred_check
      _
    $region26: #{tpu_custom_call.1} parent=5 // pred_check_branch
      %119 = sbr.rel (%p116) target = $region28
    $region27: #{tpu_custom_call.1} parent=5 // pred_region
      %s120 = ssub.s32 %s10, 1
      %s121 = smul.u32 4, %s15
      %p122 = scmp.lt.s32.totalorder %s121, 7
      %s123 = scalar_select %p122, %s121, 7
      %s124 = smul.addr %s123, 8
      %s125 = scalar_lea.vmem %s1, %s124
      %p126 = pneg %p36
      %p127 = pneg %p33
      %p128 = pneg %p57
      %p129 = pneg %p54
      %p130 = pneg %p83
      %p131 = pneg %p80
      %s132 = smul.u32 4, %s15
      %p133 = scmp.lt.s32.totalorder %s132, 7
      %s134 = scalar_select %p133, %s132, 7
      %s135 = smul.addr %s134, 8
      %s136 = scalar_lea.vmem %s3, %s135
      %s137 = smul.u32 4, %s15
      %p138 = scmp.lt.s32.totalorder %s137, 7
      %s139 = scalar_select %p138, %s137, 7
      %s140 = smul.addr %s139, 8
      %s141 = scalar_lea.vmem %s1, %s140
      %s142 = smul.u32 4, %s15
      %s143 = smul.u32 4, %s15
      %p144 = scmp.lt.s32.totalorder %s143, 7
      %s145 = scalar_select %p144, %s143, 7
      %s146 = smul.addr %s145, 8
      %s147 = scalar_lea.vmem %s3, %s146
      %s148 = smul.u32 4, %s15
      %s149 = smul.u32 %s15, 32
      %s150 = sld [smem:[#allocation3]]
      %v151 = vlaneseq
      %v152 = vshrl.u32 %v151, 7
      %v153 = vadd.s32 %v152, 8
      %v154 = vadd.s32 %v152, 16
      %v155 = vadd.s32 %v152, 24
      %v156 = vstv %s149
      %v157 = vadd.s32 %v152, %v156
      %v158 = vadd.s32 %v153, %v156
      %v159 = vadd.s32 %v154, %v156
      %v160 = vadd.s32 %v155, %v156
      %v161 = vlaneseq
      %v162 = vand.u32 %v161, 127
      %v163 = vshll.u32 %v157, 5
      %v164 = vshll.u32 %v158, 5
      %v165 = vshll.u32 %v159, 5
      %v166 = vshll.u32 %v160, 5
      %v167 = vor.u32 %v163, %v162
      %v168 = vor.u32 %v164, %v162
      %v169 = vor.u32 %v165, %v162
      %v170 = vor.u32 %v166, %v162
      %v171 = vstv %s150
      %v172 = vxor.u32 %v167, %v171
      %v173 = vxor.u32 %v168, %v171
      %v174 = vxor.u32 %v169, %v171
      %v175 = vxor.u32 %v170, %v171
      %v176 = vmul.u32 %v172, 2654435769
      %v177 = vmul.u32 %v173, 2654435769
      %v178 = vmul.u32 %v174, 2654435769
      %v179 = vmul.u32 %v175, 2654435769
      %v180 = vshrl.u32 %v176, 16
      %v181 = vshrl.u32 %v177, 16
      %v182 = vshrl.u32 %v178, 16
      %v183 = vshrl.u32 %v179, 16
      %v184 = vxor.u32 %v176, %v180
      %v185 = vxor.u32 %v177, %v181
      %v186 = vxor.u32 %v178, %v182
      %v187 = vxor.u32 %v179, %v183
      %v188 = vmul.u32 %v184, 2146121005
      %v189 = vmul.u32 %v185, 2146121005
      %v190 = vmul.u32 %v186, 2146121005
      %v191 = vmul.u32 %v187, 2146121005
      %v192 = vshrl.u32 %v188, 15
      %v193 = vshrl.u32 %v189, 15
      %v194 = vshrl.u32 %v190, 15
      %v195 = vshrl.u32 %v191, 15
      %v196 = vxor.u32 %v188, %v192
      %v197 = vxor.u32 %v189, %v193
      %v198 = vxor.u32 %v190, %v194
      %v199 = vxor.u32 %v191, %v195
      %v200 = vmul.u32 %v196, 2221713035
      %v201 = vmul.u32 %v197, 2221713035
      %v202 = vmul.u32 %v198, 2221713035
      %v203 = vmul.u32 %v199, 2221713035
      %v204 = vshrl.u32 %v200, 16
      %v205 = vshrl.u32 %v201, 16
      %v206 = vshrl.u32 %v202, 16
      %v207 = vshrl.u32 %v203, 16
      %v208 = vxor.u32 %v200, %v204
      %v209 = vxor.u32 %v201, %v205
      %v210 = vxor.u32 %v202, %v206
      %v211 = vxor.u32 %v203, %v207
      %v212 = vld [vmem:[%s2] sm:$0xff]
      %v213 = vld [vmem:[%s2 + $0x8] sm:$0xff]
      %v214 = vld [vmem:[%s2 + $0x10] sm:$0xff]
      %v215 = vld [vmem:[%s2 + $0x18] sm:$0xff]
      %v216 = vld [vmem:[%s2 + $0x20] sm:$0xff]
      %v217 = vld [vmem:[%s2 + $0x28] sm:$0xff]
      %v218 = vld [vmem:[%s2 + $0x30] sm:$0xff]
      %v219 = vld [vmem:[%s2 + $0x38] sm:$0xff]
      %v220 = vld [vmem:[%s2 + $0x40] sm:$0xff]
      %v221 = vld [vmem:[%s2 + $0x48] sm:$0xf]
      %v222 = vld [vmem:[%s141] sm:$0xff]
      %v223 = vld [vmem:[%s141 + $0x8] sm:$0xff]
      %v224 = vld [vmem:[%s141 + $0x10] sm:$0xff]
      %v225 = vld [vmem:[%s141 + $0x18] sm:$0xff]
      %v226 = vlaneseq
      %v227 = vshrl.u32 %v226, 7
      %v228 = vsub.s32 0, %v227
      %v229 = vrot.slane %v216, %v228
      %vm230 = vcmask 261120
      %v232 = vsel %vm230, %v222, 0
      %v235 = vsel %vm230, %v223, 0
      %v238 = vsel %vm230, %v224, 0
      %v241 = vsel %vm230, %v225, 0
      %243 = vmatprep.subr.mxu0 0.0
      %244 = vmatpush1.msra.mxu0 0.0
      %245 = vmatprep.subr.mxu0 0.0
      %246 = vmatpush1.msra.mxu0 0.0
      %247 = vmatprep.subr.mxu0 0.0
      %248 = vmatpush1.msra.mxu0 0.0
      %249 = vmatprep.subr.mxu0 0.0
      %250 = vmatpush1.msra.mxu0 0.0
      %251 = vmatprep.subr.mxu0 0.0
      %252 = vmatpush1.msra.mxu0 0.0
      %253 = vmatprep.subr.mxu0 0.0
      %254 = vmatpush1.msra.mxu0 0.0
      %255 = vmatprep.subr.mxu0 0.0
      %256 = vmatpush1.msra.mxu0 0.0
      %257 = vmatprep.subr.mxu0 0.0
      %258 = vmatpush1.msra.mxu0 0.0
      %259 = vmatprep.subr.mxu0 0.0
      %260 = vmatpush1.msra.mxu0 0.0
      %261 = vmatprep.subr.mxu0 0.0
      %262 = vmatpush1.msra.mxu0 0.0
      %263 = vmatprep.subr.mxu0 0.0
      %264 = vmatpush1.msra.mxu0 0.0
      %265 = vmatprep.subr.mxu0 0.0
      %266 = vmatpush1.msra.mxu0 0.0
      %267 = vmatprep.subr.mxu0 0.0
      %268 = vmatpush1.msra.mxu0 %v215
      %269 = vmatprep.subr.mxu0 0.0
      %270 = vmatpush1.msra.mxu0 %v214
      %271 = vmatprep.subr.mxu0 0.0
      %272 = vmatpush1.msra.mxu0 %v213
      %273 = vmatprep.subr.mxu0 0.0
      %274 = vmatpush1.msra.mxu0 %v212
      %275 = vmatprep.subr.mxu0 0.0
      %276 = vmatpush2.msra.mxu0 0.0
      %277 = vmatprep.subr.mxu0 0.0
      %278 = vmatpush2.msra.mxu0 0.0
      %279 = vmatprep.subr.mxu0 0.0
      %280 = vmatpush2.msra.mxu0 0.0
      %281 = vmatprep.subr.mxu0 0.0
      %282 = vmatpush2.msra.mxu0 0.0
      %283 = vmatprep.subr.mxu0 0.0
      %284 = vmatpush2.msra.mxu0 0.0
      %285 = vmatprep.subr.mxu0 0.0
      %286 = vmatpush2.msra.mxu0 0.0
      %287 = vmatprep.subr.mxu0 0.0
      %288 = vmatpush2.msra.mxu0 0.0
      %289 = vmatprep.subr.mxu0 0.0
      %290 = vmatpush2.msra.mxu0 0.0
      %291 = vmatprep.subr.mxu0 0.0
      %292 = vmatpush2.msra.mxu0 0.0
      %293 = vmatprep.subr.mxu0 0.0
      %294 = vmatpush2.msra.mxu0 0.0
      %295 = vmatprep.subr.mxu0 0.0
      %296 = vmatpush2.msra.mxu0 0.0
      %297 = vmatprep.subr.mxu0 0.0
      %298 = vmatpush2.msra.mxu0 0.0
      %299 = vmatprep.subr.mxu0 0.0
      %300 = vmatpush2.msra.mxu0 0.0
      %301 = vmatprep.subr.mxu0 0.0
      %302 = vmatpush2.msra.mxu0 0.0
      %303 = vmatprep.subr.mxu0 0.0
      %304 = vmatpush2.msra.mxu0 0.0
      %305 = vmatprep.subr.mxu0 0.0
      %306 = vmatpush2.msra.mxu0 0.0
      %307 = vmatprep.mubr.f32.mxu0 0.0
      %308 = vmatmul.mubr.f32.gmra.mxu0 %v232
      %v309 = vpop.f32.mrf.mxu0
      %v310 = vadd.f32 %v229, %v309
      %v311 = vpop.f32.mrf.mxu0
      %312 = vmatprep.mubr.f32.mxu0 0.0
      %313 = vmatmul.mubr.f32.gmra.mxu0 %v235
      %v314 = vpop.f32.mrf.mxu0
      %v315 = vadd.f32 %v229, %v314
      %v316 = vpop.f32.mrf.mxu0
      %317 = vmatprep.mubr.f32.mxu0 0.0
      %318 = vmatmul.mubr.f32.gmra.mxu0 %v238
      %v319 = vpop.f32.mrf.mxu0
      %v320 = vadd.f32 %v229, %v319
      %v321 = vpop.f32.mrf.mxu0
      %322 = vmatprep.mubr.f32.mxu0 0.0
      %323 = vmatmul.mubr.f32.gmra.mxu0 %v241
      %v324 = vpop.f32.mrf.mxu0
      %v325 = vadd.f32 %v229, %v324
      %v326 = vpop.f32.mrf.mxu0
      %327 = vdwg.mxu0
      %v328 = vmax.f32 %v310, 0.0
      %v329 = vmax.f32 %v315, 0.0
      %v330 = vmax.f32 %v320, 0.0
      %v331 = vmax.f32 %v325, 0.0
      %v332 = vand.u32 %v208, 255
      %v333 = vand.u32 %v209, 255
      %v334 = vand.u32 %v210, 255
      %v335 = vand.u32 %v211, 255
      %vm336 = vcmp.ge.u32.totalorder %v332, 77
      %vm337 = vcmp.ge.u32.totalorder %v333, 77
      %vm338 = vcmp.ge.u32.totalorder %v334, 77
      %vm339 = vcmp.ge.u32.totalorder %v335, 77
      %v340 = vmul.f32 %v328, 1.4301676
      %v341 = vmul.f32 %v329, 1.4301676
      %v342 = vmul.f32 %v330, 1.4301676
      %v343 = vmul.f32 %v331, 1.4301676
      %v344 = vsel %vm336, %v340, 0.0
      %v345 = vsel %vm337, %v341, 0.0
      %v346 = vsel %vm338, %v342, 0.0
      %v347 = vsel %vm339, %v343, 0.0
      %v348 = vlaneseq
      %v349 = vshrl.u32 %v348, 7
      %v350 = vsub.s32 3, %v349
      %v351 = vrot.slane %v217, %v350
      %vm354 = vcmask 1046528
      %v355 = vrot.slane %v216, 1
      %v356 = vrot.slane %v217, 1
      %v357 = vsel %vm354, %v355, %v356
      %vm359 = vcmask 80896
      %v361 = vsel %vm359, %v344, 0
      %v364 = vsel %vm359, %v345, 0
      %v367 = vsel %vm359, %v346, 0
      %v370 = vsel %vm359, %v347, 0
      %vm372 = vcmask 1041408
      %v373 = vsel %vm372, %v356, 0
      %375 = vmatprep.subr.mxu0 0.0
      %376 = vmatpush1.msra.mxu0 0.0
      %377 = vmatprep.subr.mxu0 0.0
      %378 = vmatpush1.msra.mxu0 0.0
      %379 = vmatprep.subr.mxu0 0.0
      %380 = vmatpush1.msra.mxu0 0.0
      %381 = vmatprep.subr.mxu0 0.0
      %382 = vmatpush1.msra.mxu0 0.0
      %383 = vmatprep.subr.mxu0 0.0
      %384 = vmatpush1.msra.mxu0 0.0
      %385 = vmatprep.subr.mxu0 0.0
      %386 = vmatpush1.msra.mxu0 0.0
      %387 = vmatprep.subr.mxu0 0.0
      %388 = vmatpush1.msra.mxu0 0.0
      %389 = vmatprep.subr.mxu0 0.0
      %390 = vmatpush1.msra.mxu0 0.0
      %391 = vmatprep.subr.mxu0 0.0
      %392 = vmatpush1.msra.mxu0 0.0
      %393 = vmatprep.subr.mxu0 0.0
      %394 = vmatpush1.msra.mxu0 0.0
      %395 = vmatprep.subr.mxu0 0.0
      %396 = vmatpush1.msra.mxu0 0.0
      %397 = vmatprep.subr.mxu0 0.0
      %398 = vmatpush1.msra.mxu0 0.0
      %399 = vmatprep.subr.mxu0 0.0
      %400 = vmatpush1.msra.mxu0 0.0
      %401 = vmatprep.subr.mxu0 0.0
      %402 = vmatpush1.msra.mxu0 0.0
      %403 = vmatprep.subr.mxu0 0.0
      %404 = vmatpush1.msra.mxu0 %v373
      %405 = vmatprep.subr.mxu0 0.0
      %406 = vmatpush1.msra.mxu0 %v357
      %407 = vmatprep.subr.mxu0 0.0
      %408 = vmatpush2.msra.mxu0 0.0
      %409 = vmatprep.subr.mxu0 0.0
      %410 = vmatpush2.msra.mxu0 0.0
      %411 = vmatprep.subr.mxu0 0.0
      %412 = vmatpush2.msra.mxu0 0.0
      %413 = vmatprep.subr.mxu0 0.0
      %414 = vmatpush2.msra.mxu0 0.0
      %415 = vmatprep.subr.mxu0 0.0
      %416 = vmatpush2.msra.mxu0 0.0
      %417 = vmatprep.subr.mxu0 0.0
      %418 = vmatpush2.msra.mxu0 0.0
      %419 = vmatprep.subr.mxu0 0.0
      %420 = vmatpush2.msra.mxu0 0.0
      %421 = vmatprep.subr.mxu0 0.0
      %422 = vmatpush2.msra.mxu0 0.0
      %423 = vmatprep.subr.mxu0 0.0
      %424 = vmatpush2.msra.mxu0 0.0
      %425 = vmatprep.subr.mxu0 0.0
      %426 = vmatpush2.msra.mxu0 0.0
      %427 = vmatprep.subr.mxu0 0.0
      %428 = vmatpush2.msra.mxu0 0.0
      %429 = vmatprep.subr.mxu0 0.0
      %430 = vmatpush2.msra.mxu0 0.0
      %431 = vmatprep.subr.mxu0 0.0
      %432 = vmatpush2.msra.mxu0 0.0
      %433 = vmatprep.subr.mxu0 0.0
      %434 = vmatpush2.msra.mxu0 0.0
      %435 = vmatprep.subr.mxu0 0.0
      %436 = vmatpush2.msra.mxu0 0.0
      %437 = vmatprep.subr.mxu0 0.0
      %438 = vmatpush2.msra.mxu0 0.0
      %439 = vmatprep.mubr.f32.mxu0 0.0
      %440 = vmatmul.mubr.f32.gmra.mxu0 %v361
      %v441 = vpop.f32.mrf.mxu0
      %v442 = vadd.f32 %v351, %v441
      %v443 = vpop.f32.mrf.mxu0
      %444 = vmatprep.mubr.f32.mxu0 0.0
      %445 = vmatmul.mubr.f32.gmra.mxu0 %v364
      %v446 = vpop.f32.mrf.mxu0
      %v447 = vadd.f32 %v351, %v446
      %v448 = vpop.f32.mrf.mxu0
      %449 = vmatprep.mubr.f32.mxu0 0.0
      %450 = vmatmul.mubr.f32.gmra.mxu0 %v367
      %v451 = vpop.f32.mrf.mxu0
      %v452 = vadd.f32 %v351, %v451
      %v453 = vpop.f32.mrf.mxu0
      %454 = vmatprep.mubr.f32.mxu0 0.0
      %455 = vmatmul.mubr.f32.gmra.mxu0 %v370
      %v456 = vpop.f32.mrf.mxu0
      %v457 = vadd.f32 %v351, %v456
      %v458 = vpop.f32.mrf.mxu0
      %459 = vdwg.mxu0
      %v460 = vmax.f32 %v442, 0.0
      %v461 = vmax.f32 %v447, 0.0
      %v462 = vmax.f32 %v452, 0.0
      %v463 = vmax.f32 %v457, 0.0
      %v464 = vshrl.u32 %v208, 8
      %v465 = vshrl.u32 %v209, 8
      %v466 = vshrl.u32 %v210, 8
      %v467 = vshrl.u32 %v211, 8
      %v468 = vand.u32 %v464, 255
      %v469 = vand.u32 %v465, 255
      %v470 = vand.u32 %v466, 255
      %v471 = vand.u32 %v467, 255
      %vm472 = vcmp.ge.u32.totalorder %v468, 77
      %vm473 = vcmp.ge.u32.totalorder %v469, 77
      %vm474 = vcmp.ge.u32.totalorder %v470, 77
      %vm475 = vcmp.ge.u32.totalorder %v471, 77
      %v476 = vmul.f32 %v460, 1.4301676
      %v477 = vmul.f32 %v461, 1.4301676
      %v478 = vmul.f32 %v462, 1.4301676
      %v479 = vmul.f32 %v463, 1.4301676
      %v480 = vsel %vm472, %v476, 0.0
      %v481 = vsel %vm473, %v477, 0.0
      %v482 = vsel %vm474, %v478, 0.0
      %v483 = vsel %vm475, %v479, 0.0
      %v484 = vlaneseq
      %v485 = vshrl.u32 %v484, 7
      %v486 = vsub.s32 0, %v485
      %v487 = vrot.slane %v220, %v486
      %vm490 = vcmask 1043456
      %v491 = vrot.slane %v217, 4
      %v492 = vrot.slane %v218, 4
      %v493 = vsel %vm490, %v491, %v492
      %v494 = vrot.slane %v219, 4
      %v495 = vsel %vm490, %v492, %v494
      %vm498 = vcmask 162816
      %v500 = vsel %vm498, %v480, 0
      %v503 = vsel %vm498, %v481, 0
      %v506 = vsel %vm498, %v482, 0
      %v509 = vsel %vm498, %v483, 0
      %v511 = vsel %vm490, %v494, 0
      %513 = vmatprep.subr.mxu0 0.0
      %514 = vmatpush1.msra.mxu0 0.0
      %515 = vmatprep.subr.mxu0 0.0
      %516 = vmatpush1.msra.mxu0 0.0
      %517 = vmatprep.subr.mxu0 0.0
      %518 = vmatpush1.msra.mxu0 0.0
      %519 = vmatprep.subr.mxu0 0.0
      %520 = vmatpush1.msra.mxu0 0.0
      %521 = vmatprep.subr.mxu0 0.0
      %522 = vmatpush1.msra.mxu0 0.0
      %523 = vmatprep.subr.mxu0 0.0
      %524 = vmatpush1.msra.mxu0 0.0
      %525 = vmatprep.subr.mxu0 0.0
      %526 = vmatpush1.msra.mxu0 0.0
      %527 = vmatprep.subr.mxu0 0.0
      %528 = vmatpush1.msra.mxu0 0.0
      %529 = vmatprep.subr.mxu0 0.0
      %530 = vmatpush1.msra.mxu0 0.0
      %531 = vmatprep.subr.mxu0 0.0
      %532 = vmatpush1.msra.mxu0 0.0
      %533 = vmatprep.subr.mxu0 0.0
      %534 = vmatpush1.msra.mxu0 0.0
      %535 = vmatprep.subr.mxu0 0.0
      %536 = vmatpush1.msra.mxu0 0.0
      %537 = vmatprep.subr.mxu0 0.0
      %538 = vmatpush1.msra.mxu0 0.0
      %539 = vmatprep.subr.mxu0 0.0
      %540 = vmatpush1.msra.mxu0 %v511
      %541 = vmatprep.subr.mxu0 0.0
      %542 = vmatpush1.msra.mxu0 %v495
      %543 = vmatprep.subr.mxu0 0.0
      %544 = vmatpush1.msra.mxu0 %v493
      %545 = vmatprep.subr.mxu0 0.0
      %546 = vmatpush2.msra.mxu0 0.0
      %547 = vmatprep.subr.mxu0 0.0
      %548 = vmatpush2.msra.mxu0 0.0
      %549 = vmatprep.subr.mxu0 0.0
      %550 = vmatpush2.msra.mxu0 0.0
      %551 = vmatprep.subr.mxu0 0.0
      %552 = vmatpush2.msra.mxu0 0.0
      %553 = vmatprep.subr.mxu0 0.0
      %554 = vmatpush2.msra.mxu0 0.0
      %555 = vmatprep.subr.mxu0 0.0
      %556 = vmatpush2.msra.mxu0 0.0
      %557 = vmatprep.subr.mxu0 0.0
      %558 = vmatpush2.msra.mxu0 0.0
      %559 = vmatprep.subr.mxu0 0.0
      %560 = vmatpush2.msra.mxu0 0.0
      %561 = vmatprep.subr.mxu0 0.0
      %562 = vmatpush2.msra.mxu0 0.0
      %563 = vmatprep.subr.mxu0 0.0
      %564 = vmatpush2.msra.mxu0 0.0
      %565 = vmatprep.subr.mxu0 0.0
      %566 = vmatpush2.msra.mxu0 0.0
      %567 = vmatprep.subr.mxu0 0.0
      %568 = vmatpush2.msra.mxu0 0.0
      %569 = vmatprep.subr.mxu0 0.0
      %570 = vmatpush2.msra.mxu0 0.0
      %571 = vmatprep.subr.mxu0 0.0
      %572 = vmatpush2.msra.mxu0 0.0
      %573 = vmatprep.subr.mxu0 0.0
      %574 = vmatpush2.msra.mxu0 0.0
      %575 = vmatprep.subr.mxu0 0.0
      %576 = vmatpush2.msra.mxu0 0.0
      %577 = vmatprep.mubr.f32.mxu0 0.0
      %578 = vmatmul.mubr.f32.gmra.mxu0 %v500
      %v579 = vpop.f32.mrf.mxu0
      %v580 = vadd.f32 %v487, %v579
      %v581 = vpop.f32.mrf.mxu0
      %582 = vmatprep.mubr.f32.mxu0 0.0
      %583 = vmatmul.mubr.f32.gmra.mxu0 %v503
      %v584 = vpop.f32.mrf.mxu0
      %v585 = vadd.f32 %v487, %v584
      %v586 = vpop.f32.mrf.mxu0
      %587 = vmatprep.mubr.f32.mxu0 0.0
      %588 = vmatmul.mubr.f32.gmra.mxu0 %v506
      %v589 = vpop.f32.mrf.mxu0
      %v590 = vadd.f32 %v487, %v589
      %v591 = vpop.f32.mrf.mxu0
      %592 = vmatprep.mubr.f32.mxu0 0.0
      %593 = vmatmul.mubr.f32.gmra.mxu0 %v509
      %v594 = vpop.f32.mrf.mxu0
      %v595 = vadd.f32 %v487, %v594
      %v596 = vpop.f32.mrf.mxu0
      %597 = vdwg.mxu0
      %v598 = vmax.f32 %v580, 0.0
      %v599 = vmax.f32 %v585, 0.0
      %v600 = vmax.f32 %v590, 0.0
      %v601 = vmax.f32 %v595, 0.0
      %v602 = vshrl.u32 %v208, 16
      %v603 = vshrl.u32 %v209, 16
      %v604 = vshrl.u32 %v210, 16
      %v605 = vshrl.u32 %v211, 16
      %v606 = vand.u32 %v602, 255
      %v607 = vand.u32 %v603, 255
      %v608 = vand.u32 %v604, 255
      %v609 = vand.u32 %v605, 255
      %vm610 = vcmp.ge.u32.totalorder %v606, 77
      %vm611 = vcmp.ge.u32.totalorder %v607, 77
      %vm612 = vcmp.ge.u32.totalorder %v608, 77
      %vm613 = vcmp.ge.u32.totalorder %v609, 77
      %v614 = vmul.f32 %v598, 1.4301676
      %v615 = vmul.f32 %v599, 1.4301676
      %v616 = vmul.f32 %v600, 1.4301676
      %v617 = vmul.f32 %v601, 1.4301676
      %v618 = vsel %vm610, %v614, 0.0
      %v619 = vsel %vm611, %v615, 0.0
      %v620 = vsel %vm612, %v616, 0.0
      %v621 = vsel %vm613, %v617, 0.0
      %v622 = vlaneseq
      %v623 = vshrl.u32 %v622, 7
      %v624 = vsub.s32 3, %v623
      %v625 = vrot.slane %v221, %v624
      %v628 = vrot.slane %v220, 1
      %v629 = vrot.slane %v221, 1
      %v630 = vsel %vm354, %v628, %v629
      %v633 = vsel %vm359, %v618, 0
      %v636 = vsel %vm359, %v619, 0
      %v639 = vsel %vm359, %v620, 0
      %v642 = vsel %vm359, %v621, 0
      %v644 = vsel %vm372, %v629, 0
      %646 = vmatprep.subr.mxu0 0.0
      %647 = vmatpush1.msra.mxu0 0.0
      %648 = vmatprep.subr.mxu0 0.0
      %649 = vmatpush1.msra.mxu0 0.0
      %650 = vmatprep.subr.mxu0 0.0
      %651 = vmatpush1.msra.mxu0 0.0
      %652 = vmatprep.subr.mxu0 0.0
      %653 = vmatpush1.msra.mxu0 0.0
      %654 = vmatprep.subr.mxu0 0.0
      %655 = vmatpush1.msra.mxu0 0.0
      %656 = vmatprep.subr.mxu0 0.0
      %657 = vmatpush1.msra.mxu0 0.0
      %658 = vmatprep.subr.mxu0 0.0
      %659 = vmatpush1.msra.mxu0 0.0
      %660 = vmatprep.subr.mxu0 0.0
      %661 = vmatpush1.msra.mxu0 0.0
      %662 = vmatprep.subr.mxu0 0.0
      %663 = vmatpush1.msra.mxu0 0.0
      %664 = vmatprep.subr.mxu0 0.0
      %665 = vmatpush1.msra.mxu0 0.0
      %666 = vmatprep.subr.mxu0 0.0
      %667 = vmatpush1.msra.mxu0 0.0
      %668 = vmatprep.subr.mxu0 0.0
      %669 = vmatpush1.msra.mxu0 0.0
      %670 = vmatprep.subr.mxu0 0.0
      %671 = vmatpush1.msra.mxu0 0.0
      %672 = vmatprep.subr.mxu0 0.0
      %673 = vmatpush1.msra.mxu0 0.0
      %674 = vmatprep.subr.mxu0 0.0
      %675 = vmatpush1.msra.mxu0 %v644
      %676 = vmatprep.subr.mxu0 0.0
      %677 = vmatpush1.msra.mxu0 %v630
      %678 = vmatprep.subr.mxu0 0.0
      %679 = vmatpush2.msra.mxu0 0.0
      %680 = vmatprep.subr.mxu0 0.0
      %681 = vmatpush2.msra.mxu0 0.0
      %682 = vmatprep.subr.mxu0 0.0
      %683 = vmatpush2.msra.mxu0 0.0
      %684 = vmatprep.subr.mxu0 0.0
      %685 = vmatpush2.msra.mxu0 0.0
      %686 = vmatprep.subr.mxu0 0.0
      %687 = vmatpush2.msra.mxu0 0.0
      %688 = vmatprep.subr.mxu0 0.0
      %689 = vmatpush2.msra.mxu0 0.0
      %690 = vmatprep.subr.mxu0 0.0
      %691 = vmatpush2.msra.mxu0 0.0
      %692 = vmatprep.subr.mxu0 0.0
      %693 = vmatpush2.msra.mxu0 0.0
      %694 = vmatprep.subr.mxu0 0.0
      %695 = vmatpush2.msra.mxu0 0.0
      %696 = vmatprep.subr.mxu0 0.0
      %697 = vmatpush2.msra.mxu0 0.0
      %698 = vmatprep.subr.mxu0 0.0
      %699 = vmatpush2.msra.mxu0 0.0
      %700 = vmatprep.subr.mxu0 0.0
      %701 = vmatpush2.msra.mxu0 0.0
      %702 = vmatprep.subr.mxu0 0.0
      %703 = vmatpush2.msra.mxu0 0.0
      %704 = vmatprep.subr.mxu0 0.0
      %705 = vmatpush2.msra.mxu0 0.0
      %706 = vmatprep.subr.mxu0 0.0
      %707 = vmatpush2.msra.mxu0 0.0
      %708 = vmatprep.subr.mxu0 0.0
      %709 = vmatpush2.msra.mxu0 0.0
      %710 = vmatprep.mubr.f32.mxu0 0.0
      %711 = vmatmul.mubr.f32.gmra.mxu0 %v633
      %v712 = vpop.f32.mrf.mxu0
      %v713 = vadd.f32 %v625, %v712
      %v714 = vpop.f32.mrf.mxu0
      %715 = vmatprep.mubr.f32.mxu0 0.0
      %716 = vmatmul.mubr.f32.gmra.mxu0 %v636
      %v717 = vpop.f32.mrf.mxu0
      %v718 = vadd.f32 %v625, %v717
      %v719 = vpop.f32.mrf.mxu0
      %720 = vmatprep.mubr.f32.mxu0 0.0
      %721 = vmatmul.mubr.f32.gmra.mxu0 %v639
      %v722 = vpop.f32.mrf.mxu0
      %v723 = vadd.f32 %v625, %v722
      %v724 = vpop.f32.mrf.mxu0
      %725 = vmatprep.mubr.f32.mxu0 0.0
      %726 = vmatmul.mubr.f32.gmra.mxu0 %v642
      %v727 = vpop.f32.mrf.mxu0
      %v728 = vadd.f32 %v625, %v727
      %v729 = vpop.f32.mrf.mxu0
      %730 = vdwg.mxu0
      %vm731 = vcmask 31744
      %732 = vst.msk [vmem:[%s147] sm:$0xff] %vm731, %v713
      %733 = vst.msk [vmem:[%s147 + $0x8] sm:$0xff] %vm731, %v718
      %734 = vst.msk [vmem:[%s147 + $0x10] sm:$0xff] %vm731, %v723
      %735 = vst.msk [vmem:[%s147 + $0x18] sm:$0xff] %vm731, %v728
      %s736 = smul.u32 4, %s15
      %p737 = scmp.lt.s32.totalorder %s736, 7
      %s738 = scalar_select %p737, %s736, 7
      %s739 = smul.addr %s738, 8
      %s740 = scalar_lea.vmem %s3, %s739
      // Predicated region
      $region29: #{tpu_custom_call.1} parent=27 // pred_check
        %p741 = pneg %p80
      $region30: #{tpu_custom_call.1} parent=27 // pred_check_branch
        %743 = sbr.rel (%p741) target = $region32
      $region31: #{tpu_custom_call.1} parent=27 // pred_region
        %s744 = smul.u32 4, %s15
      $region32: #{tpu_custom_call.1} parent=27 // pred_fallthru
        _
    $region28: #{tpu_custom_call.1} parent=5 // pred_fallthru
      _
    %p745 = scmp.le.s32.totalorder 2, %s10
    // Predicated region
    $region33: #{tpu_custom_call.1} parent=5 // pred_check
      %p746 = pneg %p745
    $region34: #{tpu_custom_call.1} parent=5 // pred_check_branch
      %748 = sbr.rel (%p746) target = $region36
    $region35: #{tpu_custom_call.1} parent=5 // pred_region
      %s749 = ssub.s32 %s10, 2
      // Predicated region
      $region37: #{tpu_custom_call.1} parent=35 // pred_check
        %p750 = pneg %p86
      $region38: #{tpu_custom_call.1} parent=35 // pred_check_branch
        %752 = sbr.rel (%p750) target = $region40
      $region39: #{tpu_custom_call.1} parent=35 // pred_region
        %s753 = smul.u32 4, %s16
        %p754 = scmp.lt.s32.totalorder %s753, 7
        %s755 = scalar_select %p754, %s753, 7
        %s756 = smul.addr %s755, 8
        %s757 = scalar_lea.vmem %s3, %s756
      $region40: #{tpu_custom_call.1} parent=35 // pred_fallthru
        _
    $region36: #{tpu_custom_call.1} parent=5 // pred_fallthru
      _
  $region6: #{tpu_custom_call.1} parent=0 // loop_footer
    %s14 = sadd.s32 1, %s10
  $region7: #{tpu_custom_call.1} parent=0 // loop_footer_branch
    %9 = sbr.rel target = $region3
  $region8: #{tpu_custom_call.1} parent=0 // loop_exit
    _

</llo_original>
